<compile_context>
chip_gen: v5e
topology: v5e:2x2
jax: 0.10.0
libtpu: 0.0.40
codegen_flags: <defaults>
</compile_context>

<pallas_src>
import functools

import jax
import jax.numpy as jnp
from jax.experimental import pallas as pl
from jax.experimental.pallas import tpu as pltpu

_LANE = 128
_SUBLANE = 8
_MAX_TILE_ROWS = 2048                 # (2048,128) f32 tile = 1 MiB
_MIN_CHUNK_ELEMS = _SUBLANE * _LANE   # 1024


def _distance_partial_kernel(x_ref, y_ref, o_ref, *, mode, tile_rows,
                             rows_valid, need_mask):
    """One grid step: (tile_rows, 128) input tiles -> (1, 8, 128) partial sums."""
    x = x_ref[...].astype(jnp.float32)
    y = y_ref[...].astype(jnp.float32)
    d = x - y
    if mode == "l2":
        per_elem = d * d
    elif mode == "l1":
        per_elem = jnp.abs(d)
    else:  # smooth_l1 (beta = 1.0, PyTorch default)
        ad = jnp.abs(d)
        per_elem = jnp.where(ad < 1.0, 0.5 * d * d, ad - 0.5)

    if need_mask:
        # Last tile overhangs the array; zero out rows past the valid extent.
        i = pl.program_id(0)
        row_ids = jax.lax.broadcasted_iota(jnp.int32, per_elem.shape, 0)
        row_ids = row_ids + i * tile_rows
        per_elem = jnp.where(row_ids < rows_valid, per_elem, 0.0)

    # Fold the tile's rows into one (8, 128) vreg of partial sums:
    # vreg-aligned reshape + sum over the leading axis = pure VPU adds.
    folded = per_elem.reshape(tile_rows // _SUBLANE, _SUBLANE, _LANE).sum(axis=0)
    o_ref[...] = folded.reshape(1, _SUBLANE, _LANE)


def pallas_distance_loss(x, y, mode="l2"):
    """Mean-reduced l1 / l2 / smooth_l1 distance between same-shaped arrays."""
    assert x.shape == y.shape, (x.shape, y.shape)
    assert mode in ("l1", "l2", "smooth_l1")
    n = x.size

    # Keep the original dtype (cast to f32 happens in-register inside the
    # kernel), and flatten without materializing padded copies in the common
    # case (n % 1024 == 0 for typical NCHW feature maps).
    xf = x.reshape(-1)
    yf = y.reshape(-1)
    pad = (-n) % _MIN_CHUNK_ELEMS
    if pad:
        # TODO(synk): for ragged sizes this still copies x/y once to pad to a
        # multiple of 8*128; could be removed with an in-kernel element mask.
        xf = jnp.pad(xf, (0, pad))
        yf = jnp.pad(yf, (0, pad))

    rows = xf.shape[0] // _LANE           # multiple of 8 by construction
    x2 = xf.reshape(rows, _LANE)
    y2 = yf.reshape(rows, _LANE)

    tile_rows = min(_MAX_TILE_ROWS, rows)
    num_chunks = pl.cdiv(rows, tile_rows)
    need_mask = (rows % tile_rows) != 0

    kernel = functools.partial(
        _distance_partial_kernel, mode=mode, tile_rows=tile_rows,
        rows_valid=rows, need_mask=need_mask)

    bytes_in = 2 * n * x.dtype.itemsize
    partials = pl.pallas_call(
        kernel,
        out_shape=jax.ShapeDtypeStruct((num_chunks, _SUBLANE, _LANE),
                                       jnp.float32),
        grid=(num_chunks,),
        in_specs=[
            pl.BlockSpec((tile_rows, _LANE), lambda i: (i, 0)),
            pl.BlockSpec((tile_rows, _LANE), lambda i: (i, 0)),
        ],
        out_specs=pl.BlockSpec((1, _SUBLANE, _LANE), lambda i: (i, 0, 0)),
        compiler_params=pltpu.CompilerParams(
            dimension_semantics=("parallel",)),
        cost_estimate=pl.CostEstimate(
            flops=4 * n,
            transcendentals=0,
            bytes_accessed=bytes_in + num_chunks * _SUBLANE * _LANE * 4),
    )(x2, y2)

    # Tiny final reduction over (num_chunks, 8, 128) partials + mean.
    return jnp.sum(partials) / jnp.float32(n)


class DistillationDistanceLoss:
    """JAX/Pallas port of torchocr DistillationDistanceLoss (forward only)."""

    def __init__(self, mode="l2", model_name_pairs=None, key=None,
                 name="loss_distance"):
        assert mode in ("l1", "l2", "smooth_l1")
        assert isinstance(model_name_pairs, list)
        self.mode = mode
        self.key = key
        self.model_name_pairs = model_name_pairs
        self.name = name + "_l2"

    def forward(self, predicts, batch=None):
        loss_dict = {}
        for idx, pair in enumerate(self.model_name_pairs):
            out1 = predicts[pair[0]]
            out2 = predicts[pair[1]]
            if self.key is not None:
                out1 = out1[self.key]
                out2 = out2[self.key]
            loss = pallas_distance_loss(out1, out2, mode=self.mode)
            loss_dict["{}_{}_{}_{}".format(self.name, pair[0], pair[1], idx)] = loss
        return loss_dict

    __call__ = forward


if __name__ == "__main__":
    key = jax.random.PRNGKey(0)
    k1, k2, k3, k4, k5, k6 = jax.random.split(key, 6)

    # Small NCHW feature maps from a student / teacher model.
    x_student = jax.random.normal(k1, (2, 4, 16, 16), dtype=jnp.float32)
    x_teacher = jax.random.normal(k2, (2, 4, 16, 16), dtype=jnp.float32)

    predicts = {"student": x_student, "teacher": x_teacher}
    loss_mod = DistillationDistanceLoss(
        mode="l2",
        model_name_pairs=[["student", "teacher"]],
        key=None,
        name="loss_distance",
    )
    loss_dict = jax.block_until_ready(loss_mod(predicts, batch=None))

    ref = jnp.mean((x_student - x_teacher) ** 2)
    got = loss_dict["loss_distance_l2_student_teacher_0"]
    assert jnp.allclose(got, ref, rtol=1e-5, atol=1e-6), (got, ref)

    # Extra coverage: ragged element count (pad path), l1 mode.
    a = jax.random.normal(k3, (2, 3, 7, 11), dtype=jnp.float32)
    b = jax.random.normal(k4, (2, 3, 7, 11), dtype=jnp.float32)
    got_l1 = jax.block_until_ready(pallas_distance_loss(a, b, mode="l1"))
    ref_l1 = jnp.mean(jnp.abs(a - b))
    assert jnp.allclose(got_l1, ref_l1, rtol=1e-5, atol=1e-6), (got_l1, ref_l1)

    # Extra coverage: multi-chunk parallel grid + boundary mask, smooth_l1.
    c = jax.random.normal(k5, (4, 8, 96, 96), dtype=jnp.float32)
    d = jax.random.normal(k6, (4, 8, 96, 96), dtype=jnp.float32)
    got_sl1 = jax.block_until_ready(pallas_distance_loss(c, d, mode="smooth_l1"))
    diff = c - d
    ad = jnp.abs(diff)
    ref_sl1 = jnp.mean(jnp.where(ad < 1.0, 0.5 * diff * diff, ad - 0.5))
    assert jnp.allclose(got_sl1, ref_sl1, rtol=1e-4, atol=1e-6), (got_sl1, ref_sl1)

    print("KERNEL_OK")
</pallas_src>

<mosaic_0001>
module attributes {stable_mosaic.version = 11 : i64} {
  func.func @_distance_partial_kernel(%arg0: i32, %arg1: memref<16x128xf32, #tpu.memory_space<vmem>>, %arg2: memref<16x128xf32, #tpu.memory_space<vmem>>, %arg3: memref<1x8x128xf32, #tpu.memory_space<vmem>>) attributes {dimension_semantics = [#tpu.dimension_semantics<parallel>], iteration_bounds = array<i64: 1>, scalar_prefetch = 0 : i64, scratch_operands = 0 : i64, tpu.core_type = #tpu.core_type<tc>, window_params = [{transform_indices = @transform_0, window_bounds = array<i64: 16, 128>}, {transform_indices = @transform_1, window_bounds = array<i64: 16, 128>}, {transform_indices = @transform_2, window_bounds = array<i64: 1, 8, 128>}]} {
    %c0 = arith.constant 0 : index
    %c0_0 = arith.constant 0 : index
    %0 = vector.load %arg1[%c0, %c0_0] : memref<16x128xf32, #tpu.memory_space<vmem>>, vector<16x128xf32>
    %c0_1 = arith.constant 0 : index
    %c0_2 = arith.constant 0 : index
    %1 = vector.load %arg2[%c0_1, %c0_2] : memref<16x128xf32, #tpu.memory_space<vmem>>, vector<16x128xf32>
    %2 = arith.subf %0, %1 : vector<16x128xf32>
    %3 = arith.mulf %2, %2 : vector<16x128xf32>
    %4 = vector.shape_cast %3 : vector<16x128xf32> to vector<2x8x128xf32>
    %cst = arith.constant dense<0.000000e+00> : vector<8x128xf32>
    %5 = vector.multi_reduction <add>, %4, %cst [0] : vector<2x8x128xf32> to vector<8x128xf32>
    %6 = vector.shape_cast %5 : vector<8x128xf32> to vector<1x8x128xf32>
    %c0_3 = arith.constant 0 : index
    %c0_4 = arith.constant 0 : index
    %c0_5 = arith.constant 0 : index
    %7 = vector.load %arg3[%c0_3, %c0_4, %c0_5] : memref<1x8x128xf32, #tpu.memory_space<vmem>>, vector<1x8x128xf32>
    tpu.vector_store %arg3[%c0_3, %c0_4, %c0_5], %6 {strides = array<i32>} : memref<1x8x128xf32, #tpu.memory_space<vmem>>, vector<1x8x128xf32>,
    return
  }
  func.func @transform_0(%arg0: i32) -> (i32, i32) {
    %c0_i32 = arith.constant 0 : i32
    %c0_i32_0 = arith.constant 0 : i32
    return %arg0, %c0_i32 : i32, i32
  }
  func.func @transform_1(%arg0: i32) -> (i32, i32) {
    %c0_i32 = arith.constant 0 : i32
    %c0_i32_0 = arith.constant 0 : i32
    return %arg0, %c0_i32 : i32, i32
  }
  func.func @transform_2(%arg0: i32) -> (i32, i32, i32) {
    %c0_i32 = arith.constant 0 : i32
    %c0_i32_0 = arith.constant 0 : i32
    %c0_i32_1 = arith.constant 0 : i32
    return %arg0, %c0_i32, %c0_i32_0 : i32, i32, i32
  }
}

</mosaic_0001>

<llo_original>
// kernel: tpu_custom_call.1
$region0: #{tpu_custom_call.1}
  #allocation0 [shape = 'u32[]', space=smem, size = 0x4, offset = 0x4, fixed_abs, tag = 'smem constant byte address 0x4 - core index']
  #allocation1 [shape = 'u32[72,128]{1,0:T(1,128)}', space=vmem, size = 0x9000, scoped, tag = 'internal scratch']
  %s0 = inlined_call_operand.hbm [shape: f32[16,128], index: 0, kind: input, shape index: {}]
  %s1 = inlined_call_operand.hbm [shape: f32[16,128], index: 1, kind: input, shape index: {}]
  %s2 = inlined_call_operand.hbm [shape: f32[1,8,128], index: 2, kind: output, shape index: {}]
  %s3 = sld [smem:[#allocation0]]
  $region26: #{tpu_custom_call.1} parent=0
    _
  %s5 = ssub.s32 1, %s3
  %s6 = scalar_select 0, %s5, %s3
  $region1: #{tpu_custom_call.1} parent=0
    #allocation2 [shape = 'u8[8192]{0}', space=vmem, size = 0x2000, scoped, tag = 'input window, operand 0, single buffered']
    #allocation3 [shape = 's32[1]{0}', space=sflag, size = 0x4, scoped, tag = 'scoped memory for tpu_custom_call.1']
    #allocation4 [shape = 's32[1]{0}', space=sflag, size = 0x4, scoped, tag = 'scoped memory for tpu_custom_call.1']
    #allocation5 [shape = 'u8[8192]{0}', space=vmem, size = 0x2000, scoped, tag = 'input window, operand 1, single buffered']
    #allocation6 [shape = 's32[1]{0}', space=sflag, size = 0x4, scoped, tag = 'scoped memory for tpu_custom_call.1']
    #allocation7 [shape = 'u8[4096]{0}', space=vmem, size = 0x1000, scoped, tag = 'output window, operand 0, single buffered']
    %7 = vsyncpa [#allocation3], 0
    %8 = vsyncpa [#allocation6], 0
    %9 = vsyncpa [#allocation4], 0
    // Predicated region
    $region2: #{tpu_custom_call.1} parent=1 // pred_check
      _
    $region3: #{tpu_custom_call.1} parent=1 // pred_check_branch
      %11 = sbr.rel (0) target = $region5
    $region4: #{tpu_custom_call.1} parent=1 // pred_region
      %13 = vsyncadd [#allocation3], 0
      %s14 = sshll.u32 %s0, 4
      %s15 = int_to_ptr.hbm [resolvable:$true] %s14
      %s16 = sshll.u32 [#allocation2], 4
      %s17 = int_to_ptr.vmem [resolvable:$true] %s16
      %22 = dma.hbm_to_vmem [thread:$0]  %s15, 256, %s17, [#allocation3], 128, 128, 8
    $region5: #{tpu_custom_call.1} parent=1 // pred_fallthru
      _
    // Predicated region
    $region6: #{tpu_custom_call.1} parent=1 // pred_check
      _
    $region7: #{tpu_custom_call.1} parent=1 // pred_check_branch
      %24 = sbr.rel (0) target = $region9
    $region8: #{tpu_custom_call.1} parent=1 // pred_region
      %26 = vsyncadd [#allocation6], 0
      %s27 = sshll.u32 %s1, 4
      %s28 = int_to_ptr.hbm [resolvable:$true] %s27
      %s29 = sshll.u32 [#allocation5], 4
      %s30 = int_to_ptr.vmem [resolvable:$true] %s29
      %35 = dma.hbm_to_vmem [thread:$0]  %s28, 256, %s30, [#allocation6], 128, 128, 8
    $region9: #{tpu_custom_call.1} parent=1 // pred_fallthru
      _
    // Predicated region
    $region10: #{tpu_custom_call.1} parent=1 // pred_check
      _
    $region11: #{tpu_custom_call.1} parent=1 // pred_check_branch
      %37 = sbr.rel (0) target = $region13
    $region12: #{tpu_custom_call.1} parent=1 // pred_region
      %39 = dma.done [#allocation3], 256
    $region13: #{tpu_custom_call.1} parent=1 // pred_fallthru
      _
    // Predicated region
    $region14: #{tpu_custom_call.1} parent=1 // pred_check
      _
    $region15: #{tpu_custom_call.1} parent=1 // pred_check_branch
      %41 = sbr.rel (0) target = $region17
    $region16: #{tpu_custom_call.1} parent=1 // pred_region
      %43 = dma.done [#allocation6], 256
    $region17: #{tpu_custom_call.1} parent=1 // pred_fallthru
      _
    %v44 = vld [vmem:[#allocation2] sm:$0xff]
    %v45 = vld [vmem:[#allocation2 + $0x8] sm:$0xff]
    %v46 = vld [vmem:[#allocation5] sm:$0xff]
    %v47 = vld [vmem:[#allocation5 + $0x8] sm:$0xff]
    %v48 = vsub.f32 %v44, %v46
    %v49 = vsub.f32 %v45, %v47
    %v50 = vmul.f32 %v48, %v48
    %v51 = vmul.f32 %v49, %v49
    %v52 = vadd.f32 %v50, %v51
    %53 = vst [vmem:[#allocation7] sm:$0xff] %v52
    // Predicated region
    $region18: #{tpu_custom_call.1} parent=1 // pred_check
      _
    $region19: #{tpu_custom_call.1} parent=1 // pred_check_branch
      %55 = sbr.rel (0) target = $region21
    $region20: #{tpu_custom_call.1} parent=1 // pred_region
      %57 = vsyncadd [#allocation4], 0
      %s59 = sshll.u32 [#allocation7], 4
      %s60 = int_to_ptr.vmem [resolvable:$true] %s59
      %s61 = sshll.u32 %s2, 4
      %s62 = int_to_ptr.hbm [resolvable:$true] %s61
      %64 = dma.vmem_to_hbm [thread:$0]  %s60, 128, %s62, [#allocation4]
    $region21: #{tpu_custom_call.1} parent=1 // pred_fallthru
      _
    // Predicated region
    $region22: #{tpu_custom_call.1} parent=1 // pred_check
      _
    $region23: #{tpu_custom_call.1} parent=1 // pred_check_branch
      %66 = sbr.rel (0) target = $region25
    $region24: #{tpu_custom_call.1} parent=1 // pred_region
      %68 = dma.done [#allocation4], 128
    $region25: #{tpu_custom_call.1} parent=1 // pred_fallthru
      _
    %69 = vsyncpa [#allocation3], 1
    %70 = vsyncpa [#allocation6], 1
    %71 = vsyncpa [#allocation4], 1

</llo_original>
